<compile_context>
chip_gen: v5e
topology: v5e:2x2
jax: 0.10.0
libtpu: 0.0.40
codegen_flags: <defaults>
</compile_context>

<pallas_src>
import functools
import math

import numpy as np
import jax
import jax.numpy as jnp
from jax.experimental import pallas as pl
from jax.experimental.pallas import tpu as pltpu

_EPS = 1e-5


# ----------------------------------------------------------------------------- kernel
def _resblock_kernel(B, H, W, Cin, Cout,
                     x_ref,       # (B, H, W*Cin)           bf16  lane-packed input block
                     w1_ref,      # (3*W*Cin, 2*W*Cout)     bf16  conv1 bands (BN1-scaled) | shortcut band (ssc-scaled)
                     w2_ref,      # (3*W*Cout, W*Cout)      bf16  conv2 bands (BN2-scaled)
                     bn_ref,      # (2, W*Cout)             f32   [BN1 shift, BN2+shortcut-BN shift] lane-tiled
                     out_ref):    # (B, H, W*Cout)          f32
    WCin, WCout = W * Cin, W * Cout
    M = B * H
    f32, bf16 = jnp.float32, jnp.bfloat16

    x = x_ref[...]                                               # (B, H, WCin) bf16
    zi = jnp.zeros((B, 1, WCin), bf16)
    # Fold the 3 vertical taps into K once (vertical zero pad via row concat).
    lhs1 = jnp.concatenate(
        [jnp.concatenate([zi, x[:, :H - 1, :]], axis=1),         # tap kh=0 -> row h-1
         x,                                                      # tap kh=1 -> row h
         jnp.concatenate([x[:, 1:, :], zi], axis=1)],            # tap kh=2 -> row h+1
        axis=-1).reshape(M, 3 * WCin)

    # conv1 (3x3, BN1 scale folded) + fused 1x1 projection shortcut: one MXU pass,
    # (B*H, 3*W*Cin) x (3*W*Cin, 2*W*Cout), bf16 operands, f32 accumulation.
    acc = jnp.dot(lhs1, w1_ref[...], preferred_element_type=f32)     # (M, 2*WCout)
    sc = acc[:, WCout:]                                              # shortcut branch (ssc already folded)
    mid = jnp.maximum(acc[:, :WCout] + bn_ref[0:1, :], 0.0).astype(bf16)   # BN1 shift + ReLU

    midr = mid.reshape(B, H, WCout)
    zm = jnp.zeros((B, 1, WCout), bf16)
    lhs2 = jnp.concatenate(
        [jnp.concatenate([zm, midr[:, :H - 1, :]], axis=1),
         midr,
         jnp.concatenate([midr[:, 1:, :], zm], axis=1)],
        axis=-1).reshape(M, 3 * WCout)

    # conv2 (3x3, BN2 scale folded): one MXU pass, (B*H, 3*W*Cout) x (3*W*Cout, W*Cout).
    acc2 = jnp.dot(lhs2, w2_ref[...], preferred_element_type=f32)    # (M, WCout)

    out = jnp.maximum(acc2 + sc + bn_ref[1:2, :], 0.0)               # combined BN shifts + residual ReLU
    out_ref[...] = out.reshape(B, H, WCout).astype(out_ref.dtype)


# ----------------------------------------------------------------------------- helpers
def _fold_bn(gamma, beta, mean, var, eps=_EPS):
    scale = gamma / jnp.sqrt(var + eps)
    shift = beta - mean * scale
    return scale, shift


def _band_from_taps(w_taps, W):
    """Banded weight for one vertical tap row.

    w_taps: (3, Ci, Co) = horizontal taps [kw, c, d].
    Returns B of shape (W*Ci, W*Co) with
        B[(w_out + kw - 1)*Ci + c, w_out*Co + d] = w_taps[kw, c, d]
    (out-of-range input columns dropped => implicit horizontal zero padding).
    """
    kw = jnp.arange(3)[:, None, None]
    wi = jnp.arange(W)[None, :, None]
    wo = jnp.arange(W)[None, None, :]
    mask = (wi == wo + kw - 1).astype(w_taps.dtype)          # (3, W, W)
    band = jnp.einsum("kio,kcd->icod", mask, w_taps)          # (W, Ci, W, Co)
    ci, co = w_taps.shape[1], w_taps.shape[2]
    return band.reshape(W * ci, W * co)


# ----------------------------------------------------------------------------- parameter prep (one-time)
def prepare_resblock_params(p, W, eps=_EPS):
    """One-time (per parameter set) weight banding + BN folding.  Hoisted out of
    the per-call path so the forward only moves activations."""
    Cout, Cin = p["w1"].shape[0], p["w1"].shape[1]
    WCin, WCout = W * Cin, W * Cout

    w1_hwio = jnp.transpose(p["w1"], (2, 3, 1, 0)).astype(jnp.float32)   # (3, 3, Cin, Cout)
    w2_hwio = jnp.transpose(p["w2"], (2, 3, 1, 0)).astype(jnp.float32)   # (3, 3, Cout, Cout)

    s1, b1 = _fold_bn(p["g1"], p["b1"], p["m1"], p["v1"], eps)
    s2, b2 = _fold_bn(p["g2"], p["b2"], p["m2"], p["v2"], eps)
    if "wsc" in p:   # projection shortcut
        wsc_mat = jnp.transpose(p["wsc"], (2, 3, 1, 0)).reshape(Cin, Cout).astype(jnp.float32)
        ssc, bsc = _fold_bn(p["gsc"], p["bsc"], p["msc"], p["vsc"], eps)
    else:            # identity shortcut expressed as a (free, fused) 1x1 identity conv
        # TODO(synk): identity shortcut rides the bf16 MXU here; the exact-f32 identity add is not preserved.
        assert Cin == Cout
        wsc_mat = jnp.eye(Cin, dtype=jnp.float32)
        ssc = jnp.ones((Cout,), jnp.float32)
        bsc = jnp.zeros((Cout,), jnp.float32)

    s1_t = jnp.tile(s1, W)
    s2_t = jnp.tile(s2, W)
    ssc_t = jnp.tile(ssc, W)
    b1_t = jnp.tile(b1, W)
    bfin_t = jnp.tile(b2 + bsc, W)            # BN2 shift + shortcut-BN shift, combined

    # conv1: stack the 3 vertical-tap bands along K; fold BN1 scale into the columns.
    bands1 = jnp.concatenate([_band_from_taps(w1_hwio[kh], W) for kh in range(3)],
                             axis=0) * s1_t[None, :]                               # (3*WCin, WCout)
    # Shortcut (1x1 conv, ssc folded): block-diagonal band occupying ONLY the
    # center-tap rows — no zero-band matmuls on the edge taps.
    sc_band = jnp.einsum("io,cd->icod", jnp.eye(W, dtype=jnp.float32),
                         wsc_mat).reshape(WCin, WCout) * ssc_t[None, :]
    sc_cols = jnp.concatenate([jnp.zeros((WCin, WCout), jnp.float32),
                               sc_band,
                               jnp.zeros((WCin, WCout), jnp.float32)], axis=0)     # (3*WCin, WCout)
    w1fold = jnp.concatenate([bands1, sc_cols], axis=1).astype(jnp.bfloat16)       # (3*WCin, 2*WCout)

    # conv2: 3 tap-bands stacked along K; fold BN2 scale into the columns.
    w2fold = (jnp.concatenate([_band_from_taps(w2_hwio[kh], W) for kh in range(3)],
                              axis=0) * s2_t[None, :]).astype(jnp.bfloat16)        # (3*WCout, WCout)

    bn = jnp.stack([b1_t, bfin_t]).astype(jnp.float32)                             # (2, WCout)
    return dict(w1fold=w1fold, w2fold=w2fold, bn=bn, Cin=Cin, Cout=Cout, W=W)


# ----------------------------------------------------------------------------- forward
def residual_block_forward_packed(x_packed, pp, block_batch=4):
    """Primary (packed-layout) path: x_packed (N, H, W*Cin) bf16 -> (N, H, W*Cout) f32."""
    N, H, WCin = x_packed.shape
    W, Cin, Cout = pp["W"], pp["Cin"], pp["Cout"]
    assert WCin == W * Cin
    WCout = W * Cout
    # NOTE: W*Cout should be a multiple of 128 for fully lane-dense (unmasked) stores.
    B = block_batch if N % block_batch == 0 else max(1, math.gcd(N, block_batch))

    kernel = functools.partial(_resblock_kernel, B, H, W, Cin, Cout)
    return pl.pallas_call(
        kernel,
        out_shape=jax.ShapeDtypeStruct((N, H, WCout), jnp.float32),
        grid_spec=pltpu.PrefetchScalarGridSpec(
            num_scalar_prefetch=0,
            grid=(N // B,),
            in_specs=[
                pl.BlockSpec((B, H, WCin), lambda n: (n, 0, 0)),
                # Weights / BN shifts are grid-resident (constant index maps).
                # TODO(synk): pipeline_mode=pl.Buffered(1) (or a one-shot DMA into
                #             scratch) would halve resident-weight VMEM once W-tiled
                #             weights get large at real ResNet sizes.
                pl.BlockSpec((3 * WCin, 2 * WCout), lambda n: (0, 0)),
                pl.BlockSpec((3 * WCout, WCout), lambda n: (0, 0)),
                pl.BlockSpec((2, WCout), lambda n: (0, 0)),
            ],
            out_specs=pl.BlockSpec((B, H, WCout), lambda n: (n, 0, 0)),
        ),
        compiler_params=pltpu.CompilerParams(dimension_semantics=("parallel",)),
    )(x_packed, pp["w1fold"], pp["w2fold"], pp["bn"])


def residual_block_forward(x_nchw, p, stride=1, block_batch=4, prepared=None):
    """Convenience NCHW wrapper (packing transposes only at the block-chain boundary)."""
    assert stride == 1, "stride > 1 not implemented (see TODO(synk))"
    N, Cin, H, W = x_nchw.shape
    pp = prepared if prepared is not None else prepare_resblock_params(p, W)
    # NCHW -> lane-packed (N, H, W*Cin) bf16 (lane = w*Cin + c, channels fastest).
    x_packed = jnp.transpose(x_nchw, (0, 2, 3, 1)).reshape(N, H, W * Cin).astype(jnp.bfloat16)
    out_packed = residual_block_forward_packed(x_packed, pp, block_batch=block_batch)
    Cout = pp["Cout"]
    return jnp.transpose(out_packed.reshape(N, H, W, Cout), (0, 3, 1, 2))


# ----------------------------------------------------------------------------- reference
def _reference_forward(x, p, stride=1, eps=_EPS):
    """Pure-JAX (XLA) reference, NCHW, mirrors the PyTorch module in eval mode."""
    def conv(x, w, s, pad):
        return jax.lax.conv_general_dilated(
            x, w, (s, s), padding=pad,
            dimension_numbers=("NCHW", "OIHW", "NCHW"))

    def bn(x, g, b, m, v):
        g, b, m, v = (t[None, :, None, None] for t in (g, b, m, v))
        return (x - m) / jnp.sqrt(v + eps) * g + b

    out = conv(x, p["w1"], stride, ((1, 1), (1, 1)))
    out = jax.nn.relu(bn(out, p["g1"], p["b1"], p["m1"], p["v1"]))
    out = conv(out, p["w2"], 1, ((1, 1), (1, 1)))
    out = bn(out, p["g2"], p["b2"], p["m2"], p["v2"])
    if "wsc" in p:
        sc = conv(x, p["wsc"], stride, ((0, 0), (0, 0)))
        sc = bn(sc, p["gsc"], p["bsc"], p["msc"], p["vsc"])
    else:
        sc = x
    return jax.nn.relu(out + sc)


def _make_params(key, Cin, Cout):
    ks = jax.random.split(key, 15)

    def bn_params(k0, k1, k2, k3, C):
        return dict(
            g=jax.random.normal(k0, (C,), jnp.float32) * 0.1 + 1.0,
            b=jax.random.normal(k1, (C,), jnp.float32) * 0.1,
            m=jax.random.normal(k2, (C,), jnp.float32) * 0.1,
            v=jax.random.uniform(k3, (C,), jnp.float32, minval=0.5, maxval=1.5),
        )

    p = {"w1": jax.random.normal(ks[0], (Cout, Cin, 3, 3), jnp.float32) * 0.1,
         "w2": jax.random.normal(ks[1], (Cout, Cout, 3, 3), jnp.float32) * 0.1,
         "wsc": jax.random.normal(ks[2], (Cout, Cin, 1, 1), jnp.float32) * 0.1}
    bn1 = bn_params(ks[3], ks[4], ks[5], ks[6], Cout)
    bn2 = bn_params(ks[7], ks[8], ks[9], ks[10], Cout)
    bns = bn_params(ks[11], ks[12], ks[13], ks[14], Cout)
    p.update({"g1": bn1["g"], "b1": bn1["b"], "m1": bn1["m"], "v1": bn1["v"],
              "g2": bn2["g"], "b2": bn2["b"], "m2": bn2["m"], "v2": bn2["v"],
              "gsc": bns["g"], "bsc": bns["b"], "msc": bns["m"], "vsc": bns["v"]})
    return p


if __name__ == "__main__":
    # W*Cout = 128 -> fully lane-dense output; block_batch=4 -> M = 64 rows per
    # matmul and a 4-step grid (>= 2 steps per v7x TensorCore).
    N, Cin, Cout, H, W = 16, 4, 8, 16, 16
    key = jax.random.PRNGKey(0)
    kx, kp = jax.random.split(key)
    x = jax.random.normal(kx, (N, Cin, H, W), jnp.float32)
    params = _make_params(kp, Cin, Cout)

    prepared = prepare_resblock_params(params, W)     # one-time weight banding / BN folding
    out = residual_block_forward(x, params, stride=1, block_batch=4, prepared=prepared)
    out = jax.block_until_ready(out)

    ref = jax.block_until_ready(_reference_forward(x, params, stride=1))
    assert out.shape == (N, Cout, H, W)
    # Looser tolerance: kernel feeds the MXU bf16 operands with BN scales folded
    # into bf16 weights (f32 accumulation), while the reference runs in full f32.
    if not np.allclose(np.asarray(out), np.asarray(ref), rtol=5e-2, atol=5e-2):
        raise AssertionError("Pallas residual block does not match JAX reference")

    print("KERNEL_OK")
</pallas_src>

<mosaic_0001>
module attributes {stable_mosaic.version = 11 : i64} {
  func.func @_resblock_kernel(%arg0: i32, %arg1: memref<4x16x64xbf16, #tpu.memory_space<vmem>>, %arg2: memref<192x256xbf16, #tpu.memory_space<vmem>>, %arg3: memref<384x128xbf16, #tpu.memory_space<vmem>>, %arg4: memref<2x128xf32, #tpu.memory_space<vmem>>, %arg5: memref<4x16x128xf32, #tpu.memory_space<vmem>>) attributes {dimension_semantics = [#tpu.dimension_semantics<parallel>], iteration_bounds = array<i64: 4>, scalar_prefetch = 0 : i64, scratch_operands = 0 : i64, tpu.core_type = #tpu.core_type<tc>, window_params = [{transform_indices = @transform_0, window_bounds = array<i64: 4, 16, 64>}, {pipeline_mode = #tpu.pipeline_mode<synchronous>, transform_indices = @transform_1, window_bounds = array<i64: 192, 256>}, {pipeline_mode = #tpu.pipeline_mode<synchronous>, transform_indices = @transform_2, window_bounds = array<i64: 384, 128>}, {pipeline_mode = #tpu.pipeline_mode<synchronous>, transform_indices = @transform_3, window_bounds = array<i64: 2, 128>}, {transform_indices = @transform_4, window_bounds = array<i64: 4, 16, 128>}]} {
    %c0 = arith.constant 0 : index
    %c0_0 = arith.constant 0 : index
    %c0_1 = arith.constant 0 : index
    %0 = vector.load %arg1[%c0, %c0_0, %c0_1] : memref<4x16x64xbf16, #tpu.memory_space<vmem>>, vector<4x16x64xbf16>
    %cst = arith.constant 0.000000e+00 : bf16
    %1 = vector.broadcast %cst : bf16 to vector<4x1x64xbf16>
    %2 = vector.extract_strided_slice %0 {offsets = [0, 0, 0], sizes = [4, 15, 64], strides = [1, 1, 1]} : vector<4x16x64xbf16> to vector<4x15x64xbf16>
    %3 = tpu.concatenate %1, %2 in 1 : vector<4x1x64xbf16>, vector<4x15x64xbf16> -> vector<4x16x64xbf16>
    %4 = vector.extract_strided_slice %0 {offsets = [0, 1, 0], sizes = [4, 15, 64], strides = [1, 1, 1]} : vector<4x16x64xbf16> to vector<4x15x64xbf16>
    %5 = tpu.concatenate %4, %1 in 1 : vector<4x15x64xbf16>, vector<4x1x64xbf16> -> vector<4x16x64xbf16>
    %6 = tpu.concatenate %3, %0, %5 in 2 : vector<4x16x64xbf16>, vector<4x16x64xbf16>, vector<4x16x64xbf16> -> vector<4x16x192xbf16>
    %7 = vector.shape_cast %6 : vector<4x16x192xbf16> to vector<64x192xbf16>
    %c0_2 = arith.constant 0 : index
    %c0_3 = arith.constant 0 : index
    %8 = vector.load %arg2[%c0_2, %c0_3] : memref<192x256xbf16, #tpu.memory_space<vmem>>, vector<192x256xbf16>
    %cst_4 = arith.constant dense<0.000000e+00> : vector<64x256xf32>
    %9 = tpu.matmul %7, %8, %cst_4 {dimension_numbers = #tpu.dot_dimension_numbers<[1], [0], [0], [1], [0, 0, 1, 1], [], []>} : vector<64x192xbf16>, vector<192x256xbf16>, vector<64x256xf32> -> vector<64x256xf32>
    %10 = vector.extract_strided_slice %9 {offsets = [0, 128], sizes = [64, 128], strides = [1, 1]} : vector<64x256xf32> to vector<64x128xf32>
    %11 = vector.extract_strided_slice %9 {offsets = [0, 0], sizes = [64, 128], strides = [1, 1]} : vector<64x256xf32> to vector<64x128xf32>
    %c0_5 = arith.constant 0 : index
    %c0_6 = arith.constant 0 : index
    %12 = vector.load %arg4[%c0_5, %c0_6] : memref<2x128xf32, #tpu.memory_space<vmem>>, vector<1x128xf32>
    %13 = vector.broadcast %12 : vector<1x128xf32> to vector<64x128xf32>
    %14 = arith.addf %11, %13 : vector<64x128xf32>
    %cst_7 = arith.constant 0.000000e+00 : f32
    %15 = vector.broadcast %cst_7 : f32 to vector<64x128xf32>
    %16 = arith.maximumf %14, %15 : vector<64x128xf32>
    %17 = arith.truncf %16 : vector<64x128xf32> to vector<64x128xbf16>
    %18 = vector.shape_cast %17 : vector<64x128xbf16> to vector<4x16x128xbf16>
    %cst_8 = arith.constant 0.000000e+00 : bf16
    %19 = vector.broadcast %cst_8 : bf16 to vector<4x1x128xbf16>
    %20 = vector.extract_strided_slice %18 {offsets = [0, 0, 0], sizes = [4, 15, 128], strides = [1, 1, 1]} : vector<4x16x128xbf16> to vector<4x15x128xbf16>
    %21 = tpu.concatenate %19, %20 in 1 : vector<4x1x128xbf16>, vector<4x15x128xbf16> -> vector<4x16x128xbf16>
    %22 = vector.extract_strided_slice %18 {offsets = [0, 1, 0], sizes = [4, 15, 128], strides = [1, 1, 1]} : vector<4x16x128xbf16> to vector<4x15x128xbf16>
    %23 = tpu.concatenate %22, %19 in 1 : vector<4x15x128xbf16>, vector<4x1x128xbf16> -> vector<4x16x128xbf16>
    %24 = tpu.concatenate %21, %18, %23 in 2 : vector<4x16x128xbf16>, vector<4x16x128xbf16>, vector<4x16x128xbf16> -> vector<4x16x384xbf16>
    %25 = vector.shape_cast %24 : vector<4x16x384xbf16> to vector<64x384xbf16>
    %c0_9 = arith.constant 0 : index
    %c0_10 = arith.constant 0 : index
    %26 = vector.load %arg3[%c0_9, %c0_10] : memref<384x128xbf16, #tpu.memory_space<vmem>>, vector<384x128xbf16>
    %cst_11 = arith.constant dense<0.000000e+00> : vector<64x128xf32>
    %27 = tpu.matmul %25, %26, %cst_11 {dimension_numbers = #tpu.dot_dimension_numbers<[1], [0], [0], [1], [0, 0, 1, 1], [], []>} : vector<64x384xbf16>, vector<384x128xbf16>, vector<64x128xf32> -> vector<64x128xf32>
    %28 = arith.addf %27, %10 : vector<64x128xf32>
    %c1 = arith.constant 1 : index
    %c0_12 = arith.constant 0 : index
    %29 = vector.load %arg4[%c1, %c0_12] : memref<2x128xf32, #tpu.memory_space<vmem>>, vector<1x128xf32>
    %30 = vector.broadcast %29 : vector<1x128xf32> to vector<64x128xf32>
    %31 = arith.addf %28, %30 : vector<64x128xf32>
    %cst_13 = arith.constant 0.000000e+00 : f32
    %32 = vector.broadcast %cst_13 : f32 to vector<64x128xf32>
    %33 = arith.maximumf %31, %32 : vector<64x128xf32>
    %34 = vector.shape_cast %33 : vector<64x128xf32> to vector<4x16x128xf32>
    %c0_14 = arith.constant 0 : index
    %c0_15 = arith.constant 0 : index
    %c0_16 = arith.constant 0 : index
    %35 = vector.load %arg5[%c0_14, %c0_15, %c0_16] : memref<4x16x128xf32, #tpu.memory_space<vmem>>, vector<4x16x128xf32>
    tpu.vector_store %arg5[%c0_14, %c0_15, %c0_16], %34 {strides = array<i32>} : memref<4x16x128xf32, #tpu.memory_space<vmem>>, vector<4x16x128xf32>,
    return
  }
  func.func @transform_0(%arg0: i32) -> (i32, i32, i32) {
    %c0_i32 = arith.constant 0 : i32
    %c0_i32_0 = arith.constant 0 : i32
    %c0_i32_1 = arith.constant 0 : i32
    return %arg0, %c0_i32, %c0_i32_0 : i32, i32, i32
  }
  func.func @transform_1(%arg0: i32) -> (i32, i32) {
    %c0_i32 = arith.constant 0 : i32
    %c0_i32_0 = arith.constant 0 : i32
    %c0_i32_1 = arith.constant 0 : i32
    return %c0_i32, %c0_i32_0 : i32, i32
  }
  func.func @transform_2(%arg0: i32) -> (i32, i32) {
    %c0_i32 = arith.constant 0 : i32
    %c0_i32_0 = arith.constant 0 : i32
    %c0_i32_1 = arith.constant 0 : i32
    return %c0_i32, %c0_i32_0 : i32, i32
  }
  func.func @transform_3(%arg0: i32) -> (i32, i32) {
    %c0_i32 = arith.constant 0 : i32
    %c0_i32_0 = arith.constant 0 : i32
    %c0_i32_1 = arith.constant 0 : i32
    return %c0_i32, %c0_i32_0 : i32, i32
  }
  func.func @transform_4(%arg0: i32) -> (i32, i32, i32) {
    %c0_i32 = arith.constant 0 : i32
    %c0_i32_0 = arith.constant 0 : i32
    %c0_i32_1 = arith.constant 0 : i32
    return %arg0, %c0_i32, %c0_i32_0 : i32, i32, i32
  }
}

</mosaic_0001>

<llo_original>
// kernel: tpu_custom_call.1
$region0: #{tpu_custom_call.1}
  #allocation0 [shape = 'u32[]', space=smem, size = 0x4, offset = 0x4, fixed_abs, tag = 'smem constant byte address 0x4 - core index']
  #allocation1 [shape = 'u32[72,128]{1,0:T(1,128)}', space=vmem, size = 0x9000, scoped, tag = 'internal scratch']
  %s0 = inlined_call_operand.hbm [shape: bf16[16,16,64], index: 0, kind: input, shape index: {}]
  %s1 = inlined_call_operand.hbm [shape: bf16[192,256], index: 1, kind: input, shape index: {}]
  %s2 = inlined_call_operand.hbm [shape: bf16[384,128], index: 2, kind: input, shape index: {}]
  %s3 = inlined_call_operand.vmem [shape: f32[2,128], index: 3, kind: input, shape index: {}]
  %s4 = inlined_call_operand.hbm [shape: f32[16,16,128], index: 4, kind: output, shape index: {}]
  %s5 = sld [smem:[#allocation0]]
  $region61: #{tpu_custom_call.1} parent=0
    _
  %s7 = ssub.s32 1, %s5
  %s8 = scalar_select 0, %s7, %s5
  $region1: #{tpu_custom_call.1} parent=0
    #allocation2 [shape = 'u8[32768]{0}', space=vmem, size = 0x8000, scoped, tag = 'input window, operand 0']
    #allocation3 [shape = 's32[2]{0}', space=sflag, size = 0x8, scoped, tag = 'scoped memory for tpu_custom_call.1']
    #allocation4 [shape = 's32[2]{0}', space=sflag, size = 0x8, scoped, tag = 'scoped memory for tpu_custom_call.1']
    #allocation5 [shape = 'u8[98304]{0}', space=vmem, size = 0x18000, scoped, tag = 'input window, operand 1, single buffered']
    #allocation6 [shape = 's32[1]{0}', space=sflag, size = 0x4, scoped, tag = 'scoped memory for tpu_custom_call.1']
    #allocation7 [shape = 'u8[98304]{0}', space=vmem, size = 0x18000, scoped, tag = 'input window, operand 2, single buffered']
    #allocation8 [shape = 'u8[65536]{0}', space=vmem, size = 0x10000, scoped, tag = 'output window, operand 0']
    %9 = vsyncpa [#allocation3], 0
    %s10 = scalar_lea.sflag [#allocation3], 1
    %11 = vsyncpa %s10, 0
    %12 = vsyncpa [#allocation6], 0
    %13 = vsyncpa [#allocation4], 0
    %s14 = scalar_lea.sflag [#allocation4], 1
    %15 = vsyncpa %s14, 0
    loop: start=0, step=1, limit=6
    $region2: #{tpu_custom_call.1} parent=1 // loop_pre_header
      _
    $region3: #{tpu_custom_call.1} parent=1 // loop_header
      %s17 = sphi 0, %s21
      %p18 = scmp.ge.s32.totalorder %s17, 6
      %s27 = sphi 0, %s29
      %s30 = sphi 0, %s27
      %s31 = sphi 0, %s30
      %s47 = sphi 0, %s31
      %s51 = sphi 0, %s51
      %s53 = sphi 0, %s51
      %s54 = sphi 0, %s53
      %s68 = sphi 0, %s54
      %s72 = sphi 0, %s72
      %s74 = sphi 0, %s72
      %s75 = sphi 0, %s74
      %s89 = sphi 0, %s75
      %s93 = sphi 0, %s93
      %s95 = sphi 0, %s93
      %s96 = sphi 0, %s95
      %s110 = sphi 0, %s96
      %s116 = sphi 0, %s118
      %s119 = sphi 0, %s116
      %s120 = sphi 0, %s119
      %s136 = sphi 0, %s120
    $region4: #{tpu_custom_call.1} parent=1 // loop_header_branch
      %20 = sbr.rel (%p18) target = $region8
    $region5: #{tpu_custom_call.1} parent=1 // loop_body
      %s22 = ssub.s32 %s17, 1
      %s23 = ssub.s32 %s17, 2
      %s24 = sadd.s32 %s17, 1
      %s25 = ssub.s32 %s17, %s24
      %p26 = scmp.eq.s32.totalorder %s25, 0
      %s28 = sadd.s32 %s27, 1
      %s29 = scalar_select %p26, %s27, %s28
      %p32 = pneg %p26
      %p33 = scmp.eq.s32.totalorder %s17, 3
      %p34 = por %p32, %p33
      %p35 = scmp.ne.s32.totalorder %s27, %s30
      %p36 = scmp.eq.s32.totalorder %s17, 0
      %p37 = por %p35, %p36
      %p38 = scmp.ne.s32.totalorder %s27, %s30
      %p39 = scmp.eq.s32.totalorder %s22, 3
      %p40 = por %p38, %p39
      %p41 = scmp.ne.s32.totalorder %s30, %s31
      %p42 = scmp.eq.s32.totalorder %s22, 0
      %p43 = por %p41, %p42
      %p44 = scmp.ne.s32.totalorder %s30, %s31
      %p45 = scmp.eq.s32.totalorder %s23, 3
      %p46 = por %p44, %p45
      %p48 = scmp.ne.s32.totalorder %s31, %s47
      %p49 = scmp.eq.s32.totalorder %s23, 0
      %p50 = por %p48, %p49
      %s52 = sadd.s32 %s51, 1
      %p55 = scmp.eq.s32.totalorder %s17, 3
      %p56 = scmp.ne.s32.totalorder %s51, %s53
      %p57 = scmp.eq.s32.totalorder %s17, 0
      %p58 = por %p56, %p57
      %p59 = scmp.ne.s32.totalorder %s51, %s53
      %p60 = scmp.eq.s32.totalorder %s22, 3
      %p61 = por %p59, %p60
      %p62 = scmp.ne.s32.totalorder %s53, %s54
      %p63 = scmp.eq.s32.totalorder %s22, 0
      %p64 = por %p62, %p63
      %p65 = scmp.ne.s32.totalorder %s53, %s54
      %p66 = scmp.eq.s32.totalorder %s23, 3
      %p67 = por %p65, %p66
      %p69 = scmp.ne.s32.totalorder %s54, %s68
      %p70 = scmp.eq.s32.totalorder %s23, 0
      %p71 = por %p69, %p70
      %s73 = sadd.s32 %s72, 1
      %p76 = scmp.eq.s32.totalorder %s17, 3
      %p77 = scmp.ne.s32.totalorder %s72, %s74
      %p78 = scmp.eq.s32.totalorder %s17, 0
      %p79 = por %p77, %p78
      %p80 = scmp.ne.s32.totalorder %s72, %s74
      %p81 = scmp.eq.s32.totalorder %s22, 3
      %p82 = por %p80, %p81
      %p83 = scmp.ne.s32.totalorder %s74, %s75
      %p84 = scmp.eq.s32.totalorder %s22, 0
      %p85 = por %p83, %p84
      %p86 = scmp.ne.s32.totalorder %s74, %s75
      %p87 = scmp.eq.s32.totalorder %s23, 3
      %p88 = por %p86, %p87
      %p90 = scmp.ne.s32.totalorder %s75, %s89
      %p91 = scmp.eq.s32.totalorder %s23, 0
      %p92 = por %p90, %p91
      %s94 = sadd.s32 %s93, 1
      %p97 = scmp.eq.s32.totalorder %s17, 3
      %p98 = scmp.ne.s32.totalorder %s93, %s95
      %p99 = scmp.eq.s32.totalorder %s17, 0
      %p100 = por %p98, %p99
      %p101 = scmp.ne.s32.totalorder %s93, %s95
      %p102 = scmp.eq.s32.totalorder %s22, 3
      %p103 = por %p101, %p102
      %p104 = scmp.ne.s32.totalorder %s95, %s96
      %p105 = scmp.eq.s32.totalorder %s22, 0
      %p106 = por %p104, %p105
      %p107 = scmp.ne.s32.totalorder %s95, %s96
      %p108 = scmp.eq.s32.totalorder %s23, 3
      %p109 = por %p107, %p108
      %p111 = scmp.ne.s32.totalorder %s96, %s110
      %p112 = scmp.eq.s32.totalorder %s23, 0
      %p113 = por %p111, %p112
      %s114 = ssub.s32 %s17, %s24
      %p115 = scmp.eq.s32.totalorder %s114, 0
      %s117 = sadd.s32 %s116, 1
      %s118 = scalar_select %p115, %s116, %s117
      %p121 = pneg %p115
      %p122 = scmp.eq.s32.totalorder %s17, 3
      %p123 = por %p121, %p122
      %p124 = scmp.ne.s32.totalorder %s116, %s119
      %p125 = scmp.eq.s32.totalorder %s17, 0
      %p126 = por %p124, %p125
      %p127 = scmp.ne.s32.totalorder %s116, %s119
      %p128 = scmp.eq.s32.totalorder %s22, 3
      %p129 = por %p127, %p128
      %p130 = scmp.ne.s32.totalorder %s119, %s120
      %p131 = scmp.eq.s32.totalorder %s22, 0
      %p132 = por %p130, %p131
      %p133 = scmp.ne.s32.totalorder %s119, %s120
      %p134 = scmp.eq.s32.totalorder %s23, 3
      %p135 = por %p133, %p134
      %p137 = scmp.ne.s32.totalorder %s120, %s136
      %p138 = scmp.eq.s32.totalorder %s23, 0
      %p139 = por %p137, %p138
      %p140 = scmp.le.s32.totalorder 1, %s17
      %p141 = scmp.lt.s32.totalorder %s17, 5
      %p142 = pnand %p140, %p141
      %p143 = pneg %p142
      // Predicated region
      $region9: #{tpu_custom_call.1} parent=5 // pred_check
        _
      $region10: #{tpu_custom_call.1} parent=5 // pred_check_branch
        %145 = sbr.rel (%p142) target = $region12
      $region11: #{tpu_custom_call.1} parent=5 // pred_region
        %s146 = ssub.s32 %s17, 1
        // Predicated region
        $region13: #{tpu_custom_call.1} parent=11 // pred_check
          %p147 = pneg %p64
        $region14: #{tpu_custom_call.1} parent=11 // pred_check_branch
          %149 = sbr.rel (%p147) target = $region16
        $region15: #{tpu_custom_call.1} parent=11 // pred_region
          %151 = vsyncadd [#allocation6], 0
          %s152 = sshll.u32 %s1, 4
          %s153 = int_to_ptr.hbm [resolvable:$true] %s152
          %s154 = sshll.u32 [#allocation5], 4
          %s155 = int_to_ptr.vmem [resolvable:$true] %s154
          %160 = dma.hbm_to_vmem [thread:$0]  %s153, 3072, %s155, [#allocation6], 128, 128, 8
        $region16: #{tpu_custom_call.1} parent=11 // pred_fallthru
          _
        // Predicated region
        $region17: #{tpu_custom_call.1} parent=11 // pred_check
          %p161 = pneg %p85
        $region18: #{tpu_custom_call.1} parent=11 // pred_check_branch
          %163 = sbr.rel (%p161) target = $region20
        $region19: #{tpu_custom_call.1} parent=11 // pred_region
          %165 = vsyncadd [#allocation6], 0
          %s166 = sshll.u32 %s2, 4
          %s167 = int_to_ptr.hbm [resolvable:$true] %s166
          %s168 = sshll.u32 [#allocation7], 4
          %s169 = int_to_ptr.vmem [resolvable:$true] %s168
          %174 = dma.hbm_to_vmem [thread:$0]  %s167, 3072, %s169, [#allocation6], 64, 64, 4
        $region20: #{tpu_custom_call.1} parent=11 // pred_fallthru
          _
        // Predicated region
        $region21: #{tpu_custom_call.1} parent=11 // pred_check
          %p175 = pneg %p106
        $region22: #{tpu_custom_call.1} parent=11 // pred_check_branch
          %177 = sbr.rel (%p175) target = $region24
        $region23: #{tpu_custom_call.1} parent=11 // pred_region
          _
        $region24: #{tpu_custom_call.1} parent=11 // pred_fallthru
          _
      $region12: #{tpu_custom_call.1} parent=5 // pred_fallthru
        _
      %p178 = scmp.lt.s32.totalorder %s17, 4
      // Predicated region
      $region25: #{tpu_custom_call.1} parent=5 // pred_check
        %p179 = pneg %p178
      $region26: #{tpu_custom_call.1} parent=5 // pred_check_branch
        %181 = sbr.rel (%p179) target = $region28
      $region27: #{tpu_custom_call.1} parent=5 // pred_region
        // Predicated region
        $region29: #{tpu_custom_call.1} parent=27 // pred_check
          %p182 = pneg %p37
        $region30: #{tpu_custom_call.1} parent=27 // pred_check_branch
          %184 = sbr.rel (%p182) target = $region32
        $region31: #{tpu_custom_call.1} parent=27 // pred_region
          %s185 = sand.u32 %s27, 1
          %s186 = scalar_lea.sflag [#allocation3], %s185
          %s187 = sand.u32 %s27, 1
          %s188 = smul.addr %s187, 32
          %s189 = scalar_lea.vmem [#allocation2], %s188
          %s190 = smul.u32 4, %s17
          %192 = vsyncadd %s186, 0
          %s193 = smul.addr %s190, 2
          %s194 = smul.addr %s193, 4
          %s195 = scalar_lea.hbm %s0, %s194
          %s196 = sshll.u32 %s195, 4
          %s197 = int_to_ptr.hbm [resolvable:$true] %s196
          %s198 = sshll.u32 %s189, 4
          %s199 = int_to_ptr.vmem [resolvable:$true] %s198
          %204 = dma.hbm_to_vmem [thread:$0]  %s197, 512, %s199, %s186, 64, 64, 4
        $region32: #{tpu_custom_call.1} parent=27 // pred_fallthru
          _
      $region28: #{tpu_custom_call.1} parent=5 // pred_fallthru
        _
      %p205 = scmp.le.s32.totalorder 1, %s17
      %p206 = scmp.lt.s32.totalorder %s17, 5
      %p207 = pnand %p205, %p206
      %p208 = pneg %p207
      // Predicated region
      $region33: #{tpu_custom_call.1} parent=5 // pred_check
        _
      $region34: #{tpu_custom_call.1} parent=5 // pred_check_branch
        %210 = sbr.rel (%p207) target = $region36
      $region35: #{tpu_custom_call.1} parent=5 // pred_region
        %s211 = ssub.s32 %s17, 1
        %s212 = sand.u32 %s30, 1
        %s213 = scalar_lea.sflag [#allocation3], %s212
        %s214 = sand.u32 %s30, 1
        %s215 = smul.addr %s214, 32
        %s216 = scalar_lea.vmem [#allocation2], %s215
        // Predicated region
        $region37: #{tpu_custom_call.1} parent=35 // pred_check
          %p217 = pneg %p43
        $region38: #{tpu_custom_call.1} parent=35 // pred_check_branch
          %219 = sbr.rel (%p217) target = $region40
        $region39: #{tpu_custom_call.1} parent=35 // pred_region
          %221 = dma.done %s213, 512
        $region40: #{tpu_custom_call.1} parent=35 // pred_fallthru
          _
        // Predicated region
        $region41: #{tpu_custom_call.1} parent=35 // pred_check
          %p222 = pneg %p64
        $region42: #{tpu_custom_call.1} parent=35 // pred_check_branch
          %224 = sbr.rel (%p222) target = $region44
        $region43: #{tpu_custom_call.1} parent=35 // pred_region
          %226 = dma.done [#allocation6], 3072
        $region44: #{tpu_custom_call.1} parent=35 // pred_fallthru
          _
        // Predicated region
        $region45: #{tpu_custom_call.1} parent=35 // pred_check
          %p227 = pneg %p85
        $region46: #{tpu_custom_call.1} parent=35 // pred_check_branch
          %229 = sbr.rel (%p227) target = $region48
        $region47: #{tpu_custom_call.1} parent=35 // pred_region
          %231 = dma.done [#allocation6], 3072
        $region48: #{tpu_custom_call.1} parent=35 // pred_fallthru
          _
        %s232 = sand.u32 %s30, 1
        %s233 = scalar_lea.sflag [#allocation3], %s232
        %s234 = sand.u32 %s30, 1
        %s235 = smul.addr %s234, 32
        %s236 = scalar_lea.vmem [#allocation2], %s235
        %p237 = pneg %p43
        %p238 = pneg %p40
        %p239 = pneg %p64
        %p240 = pneg %p61
        %p241 = pneg %p85
        %p242 = pneg %p82
        %p243 = pneg %p106
        %p244 = pneg %p103
        %p245 = pneg %p132
        %p246 = pneg %p129
        %s247 = sand.u32 %s119, 1
        %s248 = scalar_lea.sflag [#allocation4], %s247
        %s249 = sand.u32 %s119, 1
        %s250 = smul.addr %s249, 64
        %s251 = scalar_lea.vmem [#allocation8], %s250
        %s252 = smul.u32 4, %s22
        %s253 = smul.u32 4, %s22
        %v255 = vld [vmem:[%s216] sm:$0xf]
        %v256 = vld [vmem:[%s216 + $0x4] sm:$0xf]
        %v257 = vld [vmem:[%s216 + $0x8] sm:$0xf]
        %v258 = vld [vmem:[%s216 + $0xc] sm:$0xf]
        %v259 = vld [vmem:[%s216 + $0x10] sm:$0xf]
        %v260 = vld [vmem:[%s216 + $0x14] sm:$0xf]
        %v261 = vld [vmem:[%s216 + $0x18] sm:$0xf]
        %v262 = vld [vmem:[%s216 + $0x1c] sm:$0xf]
        %v271 = vunpack.c.l.b16 %v255
        %v272 = vunpack.c.l.b16 %v256
        %v273 = vunpack.c.l.b16 %v257
        %v274 = vunpack.c.l.b16 %v258
        %v275 = vunpack.c.l.b16 %v259
        %v276 = vunpack.c.l.b16 %v260
        %v277 = vunpack.c.l.b16 %v261
        %v278 = vunpack.c.l.b16 %v262
        %v279 = vpack.c.b16 %v272, %v271
        %v280 = vpack.c.b16 %v274, %v273
        %v281 = vpack.c.b16 %v276, %v275
        %v282 = vpack.c.b16 %v278, %v277
        %v284 = vshrl.u32 %v279, 16
        %v286 = vrot.slane %v284, 7
        %v287 = vshll.u32 %v279, 16
        %v289 = vor.u32 %v286, %v287
        %v291 = vshrl.u32 %v280, 16
        %v293 = vrot.slane %v291, 7
        %v294 = vshll.u32 %v280, 16
        %v296 = vor.u32 %v293, %v294
        %v298 = vshrl.u32 %v281, 16
        %v300 = vrot.slane %v298, 7
        %v301 = vshll.u32 %v281, 16
        %v303 = vor.u32 %v300, %v301
        %v305 = vshrl.u32 %v282, 16
        %v307 = vrot.slane %v305, 7
        %v308 = vshll.u32 %v282, 16
        %v310 = vor.u32 %v307, %v308
        %vm315 = vcmask 1040384
        %vm316 = vsmask.f32 256
        %vm317 = vmand %vm315, %vm316
        %v318 = vsel %vm317, 0, %v289
        %v319 = vsel %vm317, 0, %v296
        %v320 = vsel %vm317, 0, %v303
        %v321 = vsel %vm317, 0, %v310
        %v322 = vrot.slane %v287, 1
        %v323 = vor.u32 %v284, %v322
        %v324 = vrot.slane %v294, 1
        %v325 = vor.u32 %v291, %v324
        %v326 = vrot.slane %v301, 1
        %v327 = vor.u32 %v298, %v326
        %v328 = vrot.slane %v308, 1
        %v329 = vor.u32 %v305, %v328
        %vm334 = vcmask 1047552
        %vm335 = vsmask.f32 7424
        %vm336 = vmand %vm334, %vm335
        %v337 = vsel %vm336, %v323, 0
        %v338 = vsel %vm336, %v325, 0
        %v339 = vsel %vm336, %v327, 0
        %v340 = vsel %vm336, %v329, 0
        %341 = vrot.lane.b32.xlu0 %v279, 64
        %v342 = vpop.permute.xlu0 %341
        %343 = vrot.lane.b32.xlu0 %v280, 64
        %v344 = vpop.permute.xlu0 %343
        %345 = vrot.lane.b32.xlu0 %v281, 64
        %v346 = vpop.permute.xlu0 %345
        %347 = vrot.lane.b32.xlu0 %v282, 64
        %v348 = vpop.permute.xlu0 %347
        %vm349 = vcmask 523264
        %v352 = vsel %vm349, %v318, %v342
        %v356 = vsel %vm349, %v319, %v344
        %v360 = vsel %vm349, %v320, %v346
        %v364 = vsel %vm349, %v321, %v348
        %v366 = vld [vmem:[#allocation5] sm:$0xff]
        %v367 = vld [vmem:[#allocation5 + $0x8] sm:$0xff]
        %v368 = vld [vmem:[#allocation5 + $0x10] sm:$0xff]
        %v369 = vld [vmem:[#allocation5 + $0x18] sm:$0xff]
        %v370 = vld [vmem:[#allocation5 + $0x20] sm:$0xff]
        %v371 = vld [vmem:[#allocation5 + $0x28] sm:$0xff]
        %v372 = vld [vmem:[#allocation5 + $0x30] sm:$0xff]
        %v373 = vld [vmem:[#allocation5 + $0x38] sm:$0xff]
        %v374 = vld [vmem:[#allocation5 + $0x40] sm:$0xff]
        %v375 = vld [vmem:[#allocation5 + $0x48] sm:$0xff]
        %v376 = vld [vmem:[#allocation5 + $0x50] sm:$0xff]
        %v377 = vld [vmem:[#allocation5 + $0x58] sm:$0xff]
        %v378 = vld [vmem:[#allocation5 + $0x60] sm:$0xff]
        %v379 = vld [vmem:[#allocation5 + $0x68] sm:$0xff]
        %v380 = vld [vmem:[#allocation5 + $0x70] sm:$0xff]
        %v381 = vld [vmem:[#allocation5 + $0x78] sm:$0xff]
        %v382 = vld [vmem:[#allocation5 + $0x80] sm:$0xff]
        %v383 = vld [vmem:[#allocation5 + $0x88] sm:$0xff]
        %v384 = vld [vmem:[#allocation5 + $0x90] sm:$0xff]
        %v385 = vld [vmem:[#allocation5 + $0x98] sm:$0xff]
        %v386 = vld [vmem:[#allocation5 + $0xa0] sm:$0xff]
        %v387 = vld [vmem:[#allocation5 + $0xa8] sm:$0xff]
        %v388 = vld [vmem:[#allocation5 + $0xb0] sm:$0xff]
        %v389 = vld [vmem:[#allocation5 + $0xb8] sm:$0xff]
        %v414 = vunpack.c.l.b16 %v366
        %v415 = vunpack.c.h.b16 %v366
        %v416 = vunpack.c.l.b16 %v367
        %v417 = vunpack.c.h.b16 %v367
        %v418 = vunpack.c.l.b16 %v368
        %v419 = vunpack.c.h.b16 %v368
        %v420 = vunpack.c.l.b16 %v369
        %v421 = vunpack.c.h.b16 %v369
        %v422 = vunpack.c.l.b16 %v370
        %v423 = vunpack.c.h.b16 %v370
        %v424 = vunpack.c.l.b16 %v371
        %v425 = vunpack.c.h.b16 %v371
        %v426 = vunpack.c.l.b16 %v372
        %v427 = vunpack.c.h.b16 %v372
        %v428 = vunpack.c.l.b16 %v373
        %v429 = vunpack.c.h.b16 %v373
        %v430 = vunpack.c.l.b16 %v374
        %v431 = vunpack.c.h.b16 %v374
        %v432 = vunpack.c.l.b16 %v375
        %v433 = vunpack.c.h.b16 %v375
        %v434 = vunpack.c.l.b16 %v376
        %v435 = vunpack.c.h.b16 %v376
        %v436 = vunpack.c.l.b16 %v377
        %v437 = vunpack.c.h.b16 %v377
        %v438 = vunpack.c.l.b16 %v378
        %v439 = vunpack.c.h.b16 %v378
        %v440 = vunpack.c.l.b16 %v379
        %v441 = vunpack.c.h.b16 %v379
        %v442 = vunpack.c.l.b16 %v380
        %v443 = vunpack.c.h.b16 %v380
        %v444 = vunpack.c.l.b16 %v381
        %v445 = vunpack.c.h.b16 %v381
        %v446 = vunpack.c.l.b16 %v382
        %v447 = vunpack.c.h.b16 %v382
        %v448 = vunpack.c.l.b16 %v383
        %v449 = vunpack.c.h.b16 %v383
        %v450 = vunpack.c.l.b16 %v384
        %v451 = vunpack.c.h.b16 %v384
        %v452 = vunpack.c.l.b16 %v385
        %v453 = vunpack.c.h.b16 %v385
        %v454 = vunpack.c.l.b16 %v386
        %v455 = vunpack.c.h.b16 %v386
        %v456 = vunpack.c.l.b16 %v387
        %v457 = vunpack.c.h.b16 %v387
        %v458 = vunpack.c.l.b16 %v388
        %v459 = vunpack.c.h.b16 %v388
        %v460 = vunpack.c.l.b16 %v389
        %v461 = vunpack.c.h.b16 %v389
        %v462 = vpack.c.b16 %v416, %v414
        %v463 = vpack.c.b16 %v417, %v415
        %v464 = vpack.c.b16 %v420, %v418
        %v465 = vpack.c.b16 %v421, %v419
        %v466 = vpack.c.b16 %v424, %v422
        %v467 = vpack.c.b16 %v425, %v423
        %v468 = vpack.c.b16 %v428, %v426
        %v469 = vpack.c.b16 %v429, %v427
        %v470 = vpack.c.b16 %v432, %v430
        %v471 = vpack.c.b16 %v433, %v431
        %v472 = vpack.c.b16 %v436, %v434
        %v473 = vpack.c.b16 %v437, %v435
        %v474 = vpack.c.b16 %v440, %v438
        %v475 = vpack.c.b16 %v441, %v439
        %v476 = vpack.c.b16 %v444, %v442
        %v477 = vpack.c.b16 %v445, %v443
        %v478 = vpack.c.b16 %v448, %v446
        %v479 = vpack.c.b16 %v449, %v447
        %v480 = vpack.c.b16 %v452, %v450
        %v481 = vpack.c.b16 %v453, %v451
        %v482 = vpack.c.b16 %v456, %v454
        %v483 = vpack.c.b16 %v457, %v455
        %v484 = vpack.c.b16 %v460, %v458
        %v485 = vpack.c.b16 %v461, %v459
        %v511 = vsel %vm349, %v337, 0
        %v514 = vsel %vm349, %v338, 0
        %v517 = vsel %vm349, %v339, 0
        %v520 = vsel %vm349, %v340, 0
        %522 = vmatpush.bf16.msra.mxu0 %v476
        %523 = vmatpush.bf16.msra.mxu0 %v474
        %524 = vmatpush.bf16.msra.mxu0 %v472
        %525 = vmatpush.bf16.msra.mxu0 %v470
        %526 = vmatpush.bf16.msra.mxu0 %v468
        %527 = vmatpush.bf16.msra.mxu0 %v466
        %528 = vmatpush.bf16.msra.mxu0 %v464
        %529 = vmatpush.bf16.msra.mxu0 %v462
        %530 = vmatmul.bf16.gmra.mxu0 %v352
        %v531 = vpop.f32.mrf.mxu0
        %v532 = vadd.f32 0.0, %v531
        %v533 = vpop.f32.mrf.mxu0
        %v534 = vadd.f32 0.0, %v533
        %535 = vmatmul.bf16.gmra.mxu0 %v356
        %v536 = vpop.f32.mrf.mxu0
        %v537 = vadd.f32 0.0, %v536
        %v538 = vpop.f32.mrf.mxu0
        %v539 = vadd.f32 0.0, %v538
        %540 = vmatmul.bf16.gmra.mxu0 %v360
        %v541 = vpop.f32.mrf.mxu0
        %v542 = vadd.f32 0.0, %v541
        %v543 = vpop.f32.mrf.mxu0
        %v544 = vadd.f32 0.0, %v543
        %545 = vmatmul.bf16.gmra.mxu0 %v364
        %v546 = vpop.f32.mrf.mxu0
        %v547 = vadd.f32 0.0, %v546
        %v548 = vpop.f32.mrf.mxu0
        %v549 = vadd.f32 0.0, %v548
        %550 = vdwg.mxu0
        %551 = vmatpush.bf16.msra.mxu0 0
        %552 = vmatpush.bf16.msra.mxu0 0
        %553 = vmatpush.bf16.msra.mxu0 0
        %554 = vmatpush.bf16.msra.mxu0 0
        %555 = vmatpush.bf16.msra.mxu0 %v484
        %556 = vmatpush.bf16.msra.mxu0 %v482
        %557 = vmatpush.bf16.msra.mxu0 %v480
        %558 = vmatpush.bf16.msra.mxu0 %v478
        %559 = vmatmul.bf16.gmra.mxu0 %v511
        %v560 = vpop.f32.mrf.mxu0
        %v561 = vadd.f32 %v532, %v560
        %v562 = vpop.f32.mrf.mxu0
        %v563 = vadd.f32 %v534, %v562
        %564 = vmatmul.bf16.gmra.mxu0 %v514
        %v565 = vpop.f32.mrf.mxu0
        %v566 = vadd.f32 %v537, %v565
        %v567 = vpop.f32.mrf.mxu0
        %v568 = vadd.f32 %v539, %v567
        %569 = vmatmul.bf16.gmra.mxu0 %v517
        %v570 = vpop.f32.mrf.mxu0
        %v571 = vadd.f32 %v542, %v570
        %v572 = vpop.f32.mrf.mxu0
        %v573 = vadd.f32 %v544, %v572
        %574 = vmatmul.bf16.gmra.mxu0 %v520
        %v575 = vpop.f32.mrf.mxu0
        %v576 = vadd.f32 %v547, %v575
        %v577 = vpop.f32.mrf.mxu0
        %v578 = vadd.f32 %v549, %v577
        %579 = vdwg.mxu0
        %580 = vmatpush.bf16.msra.mxu0 %v477
        %581 = vmatpush.bf16.msra.mxu0 %v475
        %582 = vmatpush.bf16.msra.mxu0 %v473
        %583 = vmatpush.bf16.msra.mxu0 %v471
        %584 = vmatpush.bf16.msra.mxu0 %v469
        %585 = vmatpush.bf16.msra.mxu0 %v467
        %586 = vmatpush.bf16.msra.mxu0 %v465
        %587 = vmatpush.bf16.msra.mxu0 %v463
        %588 = vmatmul.bf16.gmra.mxu0 %v352
        %v589 = vpop.f32.mrf.mxu0
        %v590 = vadd.f32 0.0, %v589
        %v591 = vpop.f32.mrf.mxu0
        %v592 = vadd.f32 0.0, %v591
        %593 = vmatmul.bf16.gmra.mxu0 %v356
        %v594 = vpop.f32.mrf.mxu0
        %v595 = vadd.f32 0.0, %v594
        %v596 = vpop.f32.mrf.mxu0
        %v597 = vadd.f32 0.0, %v596
        %598 = vmatmul.bf16.gmra.mxu0 %v360
        %v599 = vpop.f32.mrf.mxu0
        %v600 = vadd.f32 0.0, %v599
        %v601 = vpop.f32.mrf.mxu0
        %v602 = vadd.f32 0.0, %v601
        %603 = vmatmul.bf16.gmra.mxu0 %v364
        %v604 = vpop.f32.mrf.mxu0
        %v605 = vadd.f32 0.0, %v604
        %v606 = vpop.f32.mrf.mxu0
        %v607 = vadd.f32 0.0, %v606
        %608 = vdwg.mxu0
        %609 = vmatpush.bf16.msra.mxu0 0
        %610 = vmatpush.bf16.msra.mxu0 0
        %611 = vmatpush.bf16.msra.mxu0 0
        %612 = vmatpush.bf16.msra.mxu0 0
        %613 = vmatpush.bf16.msra.mxu0 %v485
        %614 = vmatpush.bf16.msra.mxu0 %v483
        %615 = vmatpush.bf16.msra.mxu0 %v481
        %616 = vmatpush.bf16.msra.mxu0 %v479
        %617 = vmatmul.bf16.gmra.mxu0 %v511
        %v618 = vpop.f32.mrf.mxu0
        %v619 = vadd.f32 %v590, %v618
        %v620 = vpop.f32.mrf.mxu0
        %v621 = vadd.f32 %v592, %v620
        %622 = vmatmul.bf16.gmra.mxu0 %v514
        %v623 = vpop.f32.mrf.mxu0
        %v624 = vadd.f32 %v595, %v623
        %v625 = vpop.f32.mrf.mxu0
        %v626 = vadd.f32 %v597, %v625
        %627 = vmatmul.bf16.gmra.mxu0 %v517
        %v628 = vpop.f32.mrf.mxu0
        %v629 = vadd.f32 %v600, %v628
        %v630 = vpop.f32.mrf.mxu0
        %v631 = vadd.f32 %v602, %v630
        %632 = vmatmul.bf16.gmra.mxu0 %v520
        %v633 = vpop.f32.mrf.mxu0
        %v634 = vadd.f32 %v605, %v633
        %v635 = vpop.f32.mrf.mxu0
        %v636 = vadd.f32 %v607, %v635
        %637 = vdwg.mxu0
        %v638 = vld [vmem:[%s3] sm:$0x1]
        %v639 = vperm.slane %v638, 0
        %v640 = vadd.f32 %v561, %v639
        %v641 = vadd.f32 %v563, %v639
        %v642 = vadd.f32 %v566, %v639
        %v643 = vadd.f32 %v568, %v639
        %v644 = vadd.f32 %v571, %v639
        %v645 = vadd.f32 %v573, %v639
        %v646 = vadd.f32 %v576, %v639
        %v647 = vadd.f32 %v578, %v639
        %v648 = vmax.f32 %v640, 0.0
        %v649 = vmax.f32 %v641, 0.0
        %v650 = vmax.f32 %v642, 0.0
        %v651 = vmax.f32 %v643, 0.0
        %v652 = vmax.f32 %v644, 0.0
        %v653 = vmax.f32 %v645, 0.0
        %v654 = vmax.f32 %v646, 0.0
        %v655 = vmax.f32 %v647, 0.0
        %v656 = vpack.c.bf16 %v648, %v648
        %v657 = vpack.c.bf16 %v649, %v649
        %v658 = vpack.c.bf16 %v650, %v650
        %v659 = vpack.c.bf16 %v651, %v651
        %v660 = vpack.c.bf16 %v652, %v652
        %v661 = vpack.c.bf16 %v653, %v653
        %v662 = vpack.c.bf16 %v654, %v654
        %v663 = vpack.c.bf16 %v655, %v655
        %v672 = vunpack.c.l.b16 %v656
        %v673 = vunpack.c.l.b16 %v657
        %v674 = vunpack.c.l.b16 %v658
        %v675 = vunpack.c.l.b16 %v659
        %v676 = vunpack.c.l.b16 %v660
        %v677 = vunpack.c.l.b16 %v661
        %v678 = vunpack.c.l.b16 %v662
        %v679 = vunpack.c.l.b16 %v663
        %v680 = vpack.c.b16 %v673, %v672
        %v681 = vpack.c.b16 %v675, %v674
        %v682 = vpack.c.b16 %v677, %v676
        %v683 = vpack.c.b16 %v679, %v678
        %v685 = vshrl.u32 %v680, 16
        %v687 = vrot.slane %v685, 7
        %v688 = vshll.u32 %v680, 16
        %v690 = vor.u32 %v687, %v688
        %v692 = vshrl.u32 %v681, 16
        %v694 = vrot.slane %v692, 7
        %v695 = vshll.u32 %v681, 16
        %v697 = vor.u32 %v694, %v695
        %v699 = vshrl.u32 %v682, 16
        %v701 = vrot.slane %v699, 7
        %v702 = vshll.u32 %v682, 16
        %v704 = vor.u32 %v701, %v702
        %v706 = vshrl.u32 %v683, 16
        %v708 = vrot.slane %v706, 7
        %v709 = vshll.u32 %v683, 16
        %v711 = vor.u32 %v708, %v709
        %v716 = vsel %vm317, 0, %v690
        %v717 = vsel %vm317, 0, %v697
        %v718 = vsel %vm317, 0, %v704
        %v719 = vsel %vm317, 0, %v711
        %v720 = vrot.slane %v688, 1
        %v721 = vor.u32 %v685, %v720
        %v722 = vrot.slane %v695, 1
        %v723 = vor.u32 %v692, %v722
        %v724 = vrot.slane %v702, 1
        %v725 = vor.u32 %v699, %v724
        %v726 = vrot.slane %v709, 1
        %v727 = vor.u32 %v706, %v726
        %v732 = vsel %vm336, %v721, 0
        %v733 = vsel %vm336, %v723, 0
        %v734 = vsel %vm336, %v725, 0
        %v735 = vsel %vm336, %v727, 0
        %v740 = vld [vmem:[#allocation7] sm:$0xf]
        %v741 = vld [vmem:[#allocation7 + $0x4] sm:$0xf]
        %v742 = vld [vmem:[#allocation7 + $0x8] sm:$0xf]
        %v743 = vld [vmem:[#allocation7 + $0xc] sm:$0xf]
        %v744 = vld [vmem:[#allocation7 + $0x10] sm:$0xf]
        %v745 = vld [vmem:[#allocation7 + $0x14] sm:$0xf]
        %v746 = vld [vmem:[#allocation7 + $0x18] sm:$0xf]
        %v747 = vld [vmem:[#allocation7 + $0x1c] sm:$0xf]
        %v748 = vld [vmem:[#allocation7 + $0x20] sm:$0xf]
        %v749 = vld [vmem:[#allocation7 + $0x24] sm:$0xf]
        %v750 = vld [vmem:[#allocation7 + $0x28] sm:$0xf]
        %v751 = vld [vmem:[#allocation7 + $0x2c] sm:$0xf]
        %v752 = vld [vmem:[#allocation7 + $0x30] sm:$0xf]
        %v753 = vld [vmem:[#allocation7 + $0x34] sm:$0xf]
        %v754 = vld [vmem:[#allocation7 + $0x38] sm:$0xf]
        %v755 = vld [vmem:[#allocation7 + $0x3c] sm:$0xf]
        %v756 = vld [vmem:[#allocation7 + $0x40] sm:$0xf]
        %v757 = vld [vmem:[#allocation7 + $0x44] sm:$0xf]
        %v758 = vld [vmem:[#allocation7 + $0x48] sm:$0xf]
        %v759 = vld [vmem:[#allocation7 + $0x4c] sm:$0xf]
        %v760 = vld [vmem:[#allocation7 + $0x50] sm:$0xf]
        %v761 = vld [vmem:[#allocation7 + $0x54] sm:$0xf]
        %v762 = vld [vmem:[#allocation7 + $0x58] sm:$0xf]
        %v763 = vld [vmem:[#allocation7 + $0x5c] sm:$0xf]
        %v764 = vld [vmem:[#allocation7 + $0x60] sm:$0xf]
        %v765 = vld [vmem:[#allocation7 + $0x64] sm:$0xf]
        %v766 = vld [vmem:[#allocation7 + $0x68] sm:$0xf]
        %v767 = vld [vmem:[#allocation7 + $0x6c] sm:$0xf]
        %v768 = vld [vmem:[#allocation7 + $0x70] sm:$0xf]
        %v769 = vld [vmem:[#allocation7 + $0x74] sm:$0xf]
        %v770 = vld [vmem:[#allocation7 + $0x78] sm:$0xf]
        %v771 = vld [vmem:[#allocation7 + $0x7c] sm:$0xf]
        %v772 = vld [vmem:[#allocation7 + $0x80] sm:$0xf]
        %v773 = vld [vmem:[#allocation7 + $0x84] sm:$0xf]
        %v774 = vld [vmem:[#allocation7 + $0x88] sm:$0xf]
        %v775 = vld [vmem:[#allocation7 + $0x8c] sm:$0xf]
        %v776 = vld [vmem:[#allocation7 + $0x90] sm:$0xf]
        %v777 = vld [vmem:[#allocation7 + $0x94] sm:$0xf]
        %v778 = vld [vmem:[#allocation7 + $0x98] sm:$0xf]
        %v779 = vld [vmem:[#allocation7 + $0x9c] sm:$0xf]
        %v780 = vld [vmem:[#allocation7 + $0xa0] sm:$0xf]
        %v781 = vld [vmem:[#allocation7 + $0xa4] sm:$0xf]
        %v782 = vld [vmem:[#allocation7 + $0xa8] sm:$0xf]
        %v783 = vld [vmem:[#allocation7 + $0xac] sm:$0xf]
        %v784 = vld [vmem:[#allocation7 + $0xb0] sm:$0xf]
        %v785 = vld [vmem:[#allocation7 + $0xb4] sm:$0xf]
        %v786 = vld [vmem:[#allocation7 + $0xb8] sm:$0xf]
        %v787 = vld [vmem:[#allocation7 + $0xbc] sm:$0xf]
        %v836 = vunpack.c.l.b16 %v740
        %v837 = vunpack.c.l.b16 %v741
        %v838 = vunpack.c.l.b16 %v742
        %v839 = vunpack.c.l.b16 %v743
        %v840 = vunpack.c.l.b16 %v744
        %v841 = vunpack.c.l.b16 %v745
        %v842 = vunpack.c.l.b16 %v746
        %v843 = vunpack.c.l.b16 %v747
        %v844 = vunpack.c.l.b16 %v748
        %v845 = vunpack.c.l.b16 %v749
        %v846 = vunpack.c.l.b16 %v750
        %v847 = vunpack.c.l.b16 %v751
        %v848 = vunpack.c.l.b16 %v752
        %v849 = vunpack.c.l.b16 %v753
        %v850 = vunpack.c.l.b16 %v754
        %v851 = vunpack.c.l.b16 %v755
        %v852 = vunpack.c.l.b16 %v756
        %v853 = vunpack.c.l.b16 %v757
        %v854 = vunpack.c.l.b16 %v758
        %v855 = vunpack.c.l.b16 %v759
        %v856 = vunpack.c.l.b16 %v760
        %v857 = vunpack.c.l.b16 %v761
        %v858 = vunpack.c.l.b16 %v762
        %v859 = vunpack.c.l.b16 %v763
        %v860 = vunpack.c.l.b16 %v764
        %v861 = vunpack.c.l.b16 %v765
        %v862 = vunpack.c.l.b16 %v766
        %v863 = vunpack.c.l.b16 %v767
        %v864 = vunpack.c.l.b16 %v768
        %v865 = vunpack.c.l.b16 %v769
        %v866 = vunpack.c.l.b16 %v770
        %v867 = vunpack.c.l.b16 %v771
        %v868 = vunpack.c.l.b16 %v772
        %v869 = vunpack.c.l.b16 %v773
        %v870 = vunpack.c.l.b16 %v774
        %v871 = vunpack.c.l.b16 %v775
        %v872 = vunpack.c.l.b16 %v776
        %v873 = vunpack.c.l.b16 %v777
        %v874 = vunpack.c.l.b16 %v778
        %v875 = vunpack.c.l.b16 %v779
        %v876 = vunpack.c.l.b16 %v780
        %v877 = vunpack.c.l.b16 %v781
        %v878 = vunpack.c.l.b16 %v782
        %v879 = vunpack.c.l.b16 %v783
        %v880 = vunpack.c.l.b16 %v784
        %v881 = vunpack.c.l.b16 %v785
        %v882 = vunpack.c.l.b16 %v786
        %v883 = vunpack.c.l.b16 %v787
        %v884 = vpack.c.b16 %v837, %v836
        %v885 = vpack.c.b16 %v839, %v838
        %v886 = vpack.c.b16 %v841, %v840
        %v887 = vpack.c.b16 %v843, %v842
        %v888 = vpack.c.b16 %v845, %v844
        %v889 = vpack.c.b16 %v847, %v846
        %v890 = vpack.c.b16 %v849, %v848
        %v891 = vpack.c.b16 %v851, %v850
        %v892 = vpack.c.b16 %v853, %v852
        %v893 = vpack.c.b16 %v855, %v854
        %v894 = vpack.c.b16 %v857, %v856
        %v895 = vpack.c.b16 %v859, %v858
        %v896 = vpack.c.b16 %v861, %v860
        %v897 = vpack.c.b16 %v863, %v862
        %v898 = vpack.c.b16 %v865, %v864
        %v899 = vpack.c.b16 %v867, %v866
        %v900 = vpack.c.b16 %v869, %v868
        %v901 = vpack.c.b16 %v871, %v870
        %v902 = vpack.c.b16 %v873, %v872
        %v903 = vpack.c.b16 %v875, %v874
        %v904 = vpack.c.b16 %v877, %v876
        %v905 = vpack.c.b16 %v879, %v878
        %v906 = vpack.c.b16 %v881, %v880
        %v907 = vpack.c.b16 %v883, %v882
        %932 = vmatpush.bf16.msra.mxu0 %v891
        %933 = vmatpush.bf16.msra.mxu0 %v890
        %934 = vmatpush.bf16.msra.mxu0 %v889
        %935 = vmatpush.bf16.msra.mxu0 %v888
        %936 = vmatpush.bf16.msra.mxu0 %v887
        %937 = vmatpush.bf16.msra.mxu0 %v886
        %938 = vmatpush.bf16.msra.mxu0 %v885
        %939 = vmatpush.bf16.msra.mxu0 %v884
        %940 = vmatmul.bf16.gmra.mxu0 %v716
        %v941 = vpop.f32.mrf.mxu0
        %v942 = vadd.f32 %v619, %v941
        %v943 = vpop.f32.mrf.mxu0
        %v944 = vadd.f32 %v621, %v943
        %945 = vmatmul.bf16.gmra.mxu0 %v717
        %v946 = vpop.f32.mrf.mxu0
        %v947 = vadd.f32 %v624, %v946
        %v948 = vpop.f32.mrf.mxu0
        %v949 = vadd.f32 %v626, %v948
        %950 = vmatmul.bf16.gmra.mxu0 %v718
        %v951 = vpop.f32.mrf.mxu0
        %v952 = vadd.f32 %v629, %v951
        %v953 = vpop.f32.mrf.mxu0
        %v954 = vadd.f32 %v631, %v953
        %955 = vmatmul.bf16.gmra.mxu0 %v719
        %v956 = vpop.f32.mrf.mxu0
        %v957 = vadd.f32 %v634, %v956
        %v958 = vpop.f32.mrf.mxu0
        %v959 = vadd.f32 %v636, %v958
        %960 = vdwg.mxu0
        %961 = vmatpush.bf16.msra.mxu0 %v899
        %962 = vmatpush.bf16.msra.mxu0 %v898
        %963 = vmatpush.bf16.msra.mxu0 %v897
        %964 = vmatpush.bf16.msra.mxu0 %v896
        %965 = vmatpush.bf16.msra.mxu0 %v895
        %966 = vmatpush.bf16.msra.mxu0 %v894
        %967 = vmatpush.bf16.msra.mxu0 %v893
        %968 = vmatpush.bf16.msra.mxu0 %v892
        %969 = vmatmul.bf16.gmra.mxu0 %v680
        %v970 = vpop.f32.mrf.mxu0
        %v971 = vadd.f32 %v942, %v970
        %v972 = vpop.f32.mrf.mxu0
        %v973 = vadd.f32 %v944, %v972
        %974 = vmatmul.bf16.gmra.mxu0 %v681
        %v975 = vpop.f32.mrf.mxu0
        %v976 = vadd.f32 %v947, %v975
        %v977 = vpop.f32.mrf.mxu0
        %v978 = vadd.f32 %v949, %v977
        %979 = vmatmul.bf16.gmra.mxu0 %v682
        %v980 = vpop.f32.mrf.mxu0
        %v981 = vadd.f32 %v952, %v980
        %v982 = vpop.f32.mrf.mxu0
        %v983 = vadd.f32 %v954, %v982
        %984 = vmatmul.bf16.gmra.mxu0 %v683
        %v985 = vpop.f32.mrf.mxu0
        %v986 = vadd.f32 %v957, %v985
        %v987 = vpop.f32.mrf.mxu0
        %v988 = vadd.f32 %v959, %v987
        %989 = vdwg.mxu0
        %990 = vmatpush.bf16.msra.mxu0 %v907
        %991 = vmatpush.bf16.msra.mxu0 %v906
        %992 = vmatpush.bf16.msra.mxu0 %v905
        %993 = vmatpush.bf16.msra.mxu0 %v904
        %994 = vmatpush.bf16.msra.mxu0 %v903
        %995 = vmatpush.bf16.msra.mxu0 %v902
        %996 = vmatpush.bf16.msra.mxu0 %v901
        %997 = vmatpush.bf16.msra.mxu0 %v900
        %998 = vmatmul.bf16.gmra.mxu0 %v732
        %v999 = vpop.f32.mrf.mxu0
        %v1000 = vadd.f32 %v971, %v999
        %v1001 = vpop.f32.mrf.mxu0
        %v1002 = vadd.f32 %v973, %v1001
        %1003 = vmatmul.bf16.gmra.mxu0 %v733
        %v1004 = vpop.f32.mrf.mxu0
        %v1005 = vadd.f32 %v976, %v1004
        %v1006 = vpop.f32.mrf.mxu0
        %v1007 = vadd.f32 %v978, %v1006
        %1008 = vmatmul.bf16.gmra.mxu0 %v734
        %v1009 = vpop.f32.mrf.mxu0
        %v1010 = vadd.f32 %v981, %v1009
        %v1011 = vpop.f32.mrf.mxu0
        %v1012 = vadd.f32 %v983, %v1011
        %1013 = vmatmul.bf16.gmra.mxu0 %v735
        %v1014 = vpop.f32.mrf.mxu0
        %v1015 = vadd.f32 %v986, %v1014
        %v1016 = vpop.f32.mrf.mxu0
        %v1017 = vadd.f32 %v988, %v1016
        %1018 = vdwg.mxu0
        %v1019 = vld [vmem:[%s3 + $0x1] sm:$0x1]
        %v1020 = vperm.slane %v1019, 0
        %v1021 = vadd.f32 %v1000, %v1020
        %v1022 = vadd.f32 %v1002, %v1020
        %v1023 = vadd.f32 %v1005, %v1020
        %v1024 = vadd.f32 %v1007, %v1020
        %v1025 = vadd.f32 %v1010, %v1020
        %v1026 = vadd.f32 %v1012, %v1020
        %v1027 = vadd.f32 %v1015, %v1020
        %v1028 = vadd.f32 %v1017, %v1020
        %v1029 = vmax.f32 %v1021, 0.0
        %v1030 = vmax.f32 %v1022, 0.0
        %v1031 = vmax.f32 %v1023, 0.0
        %v1032 = vmax.f32 %v1024, 0.0
        %v1033 = vmax.f32 %v1025, 0.0
        %v1034 = vmax.f32 %v1026, 0.0
        %v1035 = vmax.f32 %v1027, 0.0
        %v1036 = vmax.f32 %v1028, 0.0
        %1037 = vst [vmem:[%s251] sm:$0xff] %v1029
        %1038 = vst [vmem:[%s251 + $0x8] sm:$0xff] %v1030
        %1039 = vst [vmem:[%s251 + $0x10] sm:$0xff] %v1031
        %1040 = vst [vmem:[%s251 + $0x18] sm:$0xff] %v1032
        %1041 = vst [vmem:[%s251 + $0x20] sm:$0xff] %v1033
        %1042 = vst [vmem:[%s251 + $0x28] sm:$0xff] %v1034
        %1043 = vst [vmem:[%s251 + $0x30] sm:$0xff] %v1035
        %1044 = vst [vmem:[%s251 + $0x38] sm:$0xff] %v1036
        %s1045 = sand.u32 %s119, 1
        %s1046 = scalar_lea.sflag [#allocation4], %s1045
        %s1047 = sand.u32 %s119, 1
        %s1048 = smul.addr %s1047, 64
        %s1049 = scalar_lea.vmem [#allocation8], %s1048
        // Predicated region
        $region49: #{tpu_custom_call.1} parent=35 // pred_check
          %p1050 = pneg %p129
        $region50: #{tpu_custom_call.1} parent=35 // pred_check_branch
          %1052 = sbr.rel (%p1050) target = $region52
        $region51: #{tpu_custom_call.1} parent=35 // pred_region
          %s1053 = smul.u32 4, %s22
          %1055 = vsyncadd %s1046, 0
          %s1056 = smul.addr %s1053, 2
          %s1057 = smul.addr %s1056, 8
          %s1058 = scalar_lea.hbm %s4, %s1057
          %s1059 = sshll.u32 %s1049, 4
          %s1060 = int_to_ptr.vmem [resolvable:$true] %s1059
          %s1061 = sshll.u32 %s1058, 4
          %s1062 = int_to_ptr.hbm [resolvable:$true] %s1061
          %1067 = dma.vmem_to_hbm [thread:$0]  %s1060, 1024, %s1062, %s1046, 128, 128, 8
        $region52: #{tpu_custom_call.1} parent=35 // pred_fallthru
          _
      $region36: #{tpu_custom_call.1} parent=5 // pred_fallthru
        _
      %p1068 = scmp.le.s32.totalorder 2, %s17
      // Predicated region
      $region53: #{tpu_custom_call.1} parent=5 // pred_check
        %p1069 = pneg %p1068
      $region54: #{tpu_custom_call.1} parent=5 // pred_check_branch
        %1071 = sbr.rel (%p1069) target = $region56
      $region55: #{tpu_custom_call.1} parent=5 // pred_region
        %s1072 = ssub.s32 %s17, 2
        // Predicated region
        $region57: #{tpu_custom_call.1} parent=55 // pred_check
          %p1073 = pneg %p135
        $region58: #{tpu_custom_call.1} parent=55 // pred_check_branch
          %1075 = sbr.rel (%p1073) target = $region60
        $region59: #{tpu_custom_call.1} parent=55 // pred_region
          %s1076 = sand.u32 %s120, 1
          %s1077 = scalar_lea.sflag [#allocation4], %s1076
          %s1078 = sand.u32 %s120, 1
          %s1079 = smul.addr %s1078, 64
          %s1080 = scalar_lea.vmem [#allocation8], %s1079
          %1082 = dma.done %s1077, 1024
        $region60: #{tpu_custom_call.1} parent=55 // pred_fallthru
          _
      $region56: #{tpu_custom_call.1} parent=5 // pred_fallthru
        _
    $region6: #{tpu_custom_call.1} parent=1 // loop_footer
      %s21 = sadd.s32 1, %s17
    $region7: #{tpu_custom_call.1} parent=1 // loop_footer_branch
      %16 = sbr.rel target = $region3
    $region8: #{tpu_custom_call.1} parent=1 // loop_exit
      _
    %1083 = vsyncpa [#allocation3], 1
    %s1084 = scalar_lea.sflag [#allocation3], 1
    %1085 = vsyncpa %s1084, 1
    %1086 = vsyncpa [#allocation6], 1
    %1087 = vsyncpa [#allocation4], 1
    %s1088 = scalar_lea.sflag [#allocation4], 1
    %1089 = vsyncpa %s1088, 1

</llo_original>
